<compile_context>
chip_gen: v7x
topology: tpu7x:2x2x1
jax: 0.10.0
libtpu: 0.0.40
codegen_flags: <defaults>
</compile_context>

<pallas_src>
import jax
import jax.numpy as jnp
from jax.experimental import pallas as pl
from jax.experimental.pallas import tpu as pltpu

_LANES = 128      # vreg lane width
_SUBLANES = 8     # vreg sublane height for f32


def _scale_shift_kernel(w_ref, b_ref, x_ref, o_ref):
    # w_ref, b_ref: (1,) f32 scalars prefetched into SMEM.
    # x_ref, o_ref: (tile_rows, 128) f32 tiles in VMEM.
    o_ref[...] = x_ref[...] * w_ref[0] + b_ref[0]


def linear_model(x, w, b, *, tile_rows=1024):
    """nn.Linear(1, 1) forward.

    x: (N, 1) f32, w: (1, 1) f32 (PyTorch [out, in]), b: (1,) f32 -> (N, 1) f32.
    """
    n, in_f = x.shape
    assert in_f == 1 and w.shape == (1, 1) and b.shape == (1,)

    # --- lane-dense repack: (N, 1) column -> (rows, 128) slab -------------
    flat = x.reshape(-1).astype(jnp.float32)
    total = flat.shape[0]

    rows = max(_SUBLANES, -(-total // _LANES))          # ceil-div to lanes
    rows = -(-rows // _SUBLANES) * _SUBLANES            # sublane-align (mult of 8)
    tr = min(tile_rows, rows)                           # tile rows (mult of 8)
    rows = -(-rows // tr) * tr                          # grid divides evenly
    padded = rows * _LANES

    x2d = jnp.pad(flat, (0, padded - total)).reshape(rows, _LANES)

    # --- pipelined 1-D grid over row tiles ---------------------------------
    grid_spec = pltpu.PrefetchScalarGridSpec(
        num_scalar_prefetch=2,                          # w, b -> SMEM scalars
        grid=(rows // tr,),
        in_specs=[pl.BlockSpec((tr, _LANES), lambda i, w_s, b_s: (i, 0))],
        out_specs=pl.BlockSpec((tr, _LANES), lambda i, w_s, b_s: (i, 0)),
    )

    out2d = pl.pallas_call(
        _scale_shift_kernel,
        out_shape=jax.ShapeDtypeStruct((rows, _LANES), jnp.float32),
        grid_spec=grid_spec,
        compiler_params=pltpu.CompilerParams(
            dimension_semantics=("parallel",)),         # v7x: use both TCs
    )(w.reshape(-1).astype(jnp.float32), b.astype(jnp.float32), x2d)

    # Slice off the padding and restore the module's (N, 1) output shape.
    # Padded rows compute to `b` (harmless) and never leak into the result.
    return out2d.reshape(-1)[:total].reshape(n, 1)


def _reference(x, w, b):
    return x @ w.T + b


if __name__ == "__main__":
    key = jax.random.PRNGKey(0)
    k_x_small, k_x_big, k_w, k_b = jax.random.split(key, 4)

    IN_F, OUT_F = 1, 1
    # PyTorch-like uniform init for nn.Linear(1, 1): U(-1/sqrt(in), +1/sqrt(in)).
    bound = 1.0 / (IN_F ** 0.5)
    w = jax.random.uniform(k_w, (OUT_F, IN_F), minval=-bound, maxval=bound,
                           dtype=jnp.float32)
    b = jax.random.uniform(k_b, (OUT_F,), minval=-bound, maxval=bound,
                           dtype=jnp.float32)

    # Case 1: module-sized tiny batch (N=8), single grid step.
    # Case 2: batch that exercises padding + a multi-step pipelined grid
    #         (N=3077 with 8-row tiles -> rows=32, grid=(4,)).
    for n, key_x, tr in ((8, k_x_small, 1024), (3077, k_x_big, 8)):
        x = jax.random.normal(key_x, (n, IN_F), dtype=jnp.float32)
        out = jax.block_until_ready(linear_model(x, w, b, tile_rows=tr))
        ref = _reference(x, w, b)
        assert out.shape == (n, OUT_F), f"bad shape at N={n}"
        assert jnp.allclose(out, ref, atol=1e-6, rtol=1e-6), f"mismatch at N={n}"

    print("KERNEL_OK")
</pallas_src>

<mosaic_0001>
module attributes {stable_mosaic.version = 11 : i64} {
  func.func @_scale_shift_kernel(%arg0: i32, %arg1: memref<1xf32, #tpu.memory_space<smem>>, %arg2: memref<1xf32, #tpu.memory_space<smem>>, %arg3: memref<8x128xf32, #tpu.memory_space<vmem>>, %arg4: memref<8x128xf32, #tpu.memory_space<vmem>>) attributes {dimension_semantics = [#tpu.dimension_semantics<parallel>], iteration_bounds = array<i64: 1>, scalar_prefetch = 2 : i64, scratch_operands = 0 : i64, tpu.core_type = #tpu.core_type<tc>, window_params = [{transform_indices = @transform_0, window_bounds = array<i64: 8, 128>}, {transform_indices = @transform_1, window_bounds = array<i64: 8, 128>}]} {
    %c0 = arith.constant 0 : index
    %c0_0 = arith.constant 0 : index
    %0 = vector.load %arg3[%c0, %c0_0] : memref<8x128xf32, #tpu.memory_space<vmem>>, vector<8x128xf32>
    %c0_1 = arith.constant 0 : index
    %1 = memref.load %arg1[%c0_1] : memref<1xf32, #tpu.memory_space<smem>>
    %2 = vector.broadcast %1 : f32 to vector<8x128xf32>
    %3 = arith.mulf %0, %2 : vector<8x128xf32>
    %c0_2 = arith.constant 0 : index
    %4 = memref.load %arg2[%c0_2] : memref<1xf32, #tpu.memory_space<smem>>
    %5 = vector.broadcast %4 : f32 to vector<8x128xf32>
    %6 = arith.addf %3, %5 : vector<8x128xf32>
    %c0_3 = arith.constant 0 : index
    %c0_4 = arith.constant 0 : index
    %7 = vector.load %arg4[%c0_3, %c0_4] : memref<8x128xf32, #tpu.memory_space<vmem>>, vector<8x128xf32>
    tpu.vector_store %arg4[%c0_3, %c0_4], %6 {strides = array<i32>} : memref<8x128xf32, #tpu.memory_space<vmem>>, vector<8x128xf32>,
    return
  }
  func.func @transform_0(%arg0: i32, %arg1: memref<1xf32, #tpu.memory_space<smem>>, %arg2: memref<1xf32, #tpu.memory_space<smem>>) -> (i32, i32) {
    %c0_i32 = arith.constant 0 : i32
    %c0_i32_0 = arith.constant 0 : i32
    return %arg0, %c0_i32 : i32, i32
  }
  func.func @transform_1(%arg0: i32, %arg1: memref<1xf32, #tpu.memory_space<smem>>, %arg2: memref<1xf32, #tpu.memory_space<smem>>) -> (i32, i32) {
    %c0_i32 = arith.constant 0 : i32
    %c0_i32_0 = arith.constant 0 : i32
    return %arg0, %c0_i32 : i32, i32
  }
}

</mosaic_0001>

<llo_original>
// kernel: tpu_custom_call.1
$region0: #{tpu_custom_call.1}
  #allocation0 [shape = 'u32[]', space=smem, size = 0x4, offset = 0x4, fixed_abs, tag = 'smem constant byte address 0x4 - core index']
  #allocation1 [shape = 'u32[144,128]{1,0:T(1,128)}', space=vmem, size = 0x12000, scoped, tag = 'internal scratch']
  #allocation2 [shape = 's32[1]{0}', space=sflag, size = 0x4, scoped, tag = 'scoped memory for tpu_custom_call.1']
  #allocation3 [shape = 'f32[1]{0:T(128)S(6)}', space=smem, size = 0x200, scoped, tag = 'prefetched SMEM operand 0']
  #allocation4 [shape = 'f32[1]{0:T(128)S(6)}', space=smem, size = 0x200, scoped, tag = 'prefetched SMEM operand 1']
  %s0 = inlined_call_operand.<no memory space> [shape: f32[1], index: 0, kind: input, shape index: {}]
  %s1 = inlined_call_operand.<no memory space> [shape: f32[1], index: 1, kind: input, shape index: {}]
  %s2 = inlined_call_operand.hbm [shape: f32[8,128], index: 2, kind: input, shape index: {}]
  %s3 = inlined_call_operand.hbm [shape: f32[8,128], index: 3, kind: output, shape index: {}]
  %s4 = sld [smem:[#allocation0]]
  $region18: #{tpu_custom_call.1} parent=0
    _
  %s6 = ssub.s32 1, %s4
  %s7 = scalar_select 0, %s6, %s4
  %8 = sst [smem:[#allocation3]] %s0
  %9 = sst [smem:[#allocation4]] %s1
  $region1: #{tpu_custom_call.1} parent=0
    #allocation5 [shape = 'u8[4096]{0}', space=vmem, size = 0x1000, scoped, tag = 'input window, operand 2, single buffered']
    #allocation6 [shape = 's32[1]{0}', space=sflag, size = 0x4, scoped, tag = 'scoped memory for tpu_custom_call.1']
    #allocation7 [shape = 's32[1]{0}', space=sflag, size = 0x4, scoped, tag = 'scoped memory for tpu_custom_call.1']
    #allocation8 [shape = 'u8[4096]{0}', space=vmem, size = 0x1000, scoped, tag = 'output window, operand 0, single buffered']
    %10 = vsyncpa [#allocation6], 0
    %11 = vsyncpa [#allocation7], 0
    // Predicated region
    $region2: #{tpu_custom_call.1} parent=1 // pred_check
      _
    $region3: #{tpu_custom_call.1} parent=1 // pred_check_branch
      %13 = sbr.rel (0) target = $region5
    $region4: #{tpu_custom_call.1} parent=1 // pred_region
      %s15 = ssub.s32 128, 128
      %16 = vsyncadd [#allocation6], %s15
      %s18 = sshll.u32 [#allocation5], 4
      %s19 = int_to_ptr.vmem [resolvable:$true] %s18
      %21 = dma.hbm_to_vmem [thread:$0]  %s2, 128, %s19, [#allocation6]
    $region5: #{tpu_custom_call.1} parent=1 // pred_fallthru
      _
    // Predicated region
    $region6: #{tpu_custom_call.1} parent=1 // pred_check
      _
    $region7: #{tpu_custom_call.1} parent=1 // pred_check_branch
      %23 = sbr.rel (0) target = $region9
    $region8: #{tpu_custom_call.1} parent=1 // pred_region
      %24 = dma.done [#allocation6], 128
    $region9: #{tpu_custom_call.1} parent=1 // pred_fallthru
      _
    %v25 = vld [vmem:[#allocation5] sm:$0xff]
    %s26 = sld [smem:[#allocation3]]
    %v27 = vstv %s26
    %v28 = vmul.f32 %v25, %v27
    %s29 = sld [smem:[#allocation4]]
    %v30 = vstv %s29
    %v31 = vadd.f32 %v28, %v30
    %32 = vst [vmem:[#allocation8] sm:$0xff] %v31
    // Predicated region
    $region10: #{tpu_custom_call.1} parent=1 // pred_check
      _
    $region11: #{tpu_custom_call.1} parent=1 // pred_check_branch
      %34 = sbr.rel (0) target = $region13
    $region12: #{tpu_custom_call.1} parent=1 // pred_region
      %s36 = ssub.s32 128, 128
      %37 = vsyncadd [#allocation7], %s36
      %s39 = sshll.u32 [#allocation8], 4
      %s40 = int_to_ptr.vmem [resolvable:$true] %s39
      %42 = dma.vmem_to_hbm [thread:$0]  %s40, 128, %s3, [#allocation7]
    $region13: #{tpu_custom_call.1} parent=1 // pred_fallthru
      _
    // Predicated region
    $region14: #{tpu_custom_call.1} parent=1 // pred_check
      _
    $region15: #{tpu_custom_call.1} parent=1 // pred_check_branch
      %44 = sbr.rel (0) target = $region17
    $region16: #{tpu_custom_call.1} parent=1 // pred_region
      %45 = dma.done [#allocation7], 128
    $region17: #{tpu_custom_call.1} parent=1 // pred_fallthru
      _
    %46 = vsyncpa [#allocation6], 1
    %47 = vsyncpa [#allocation7], 1

</llo_original>
